<compile_context>
chip_gen: v7x
topology: tpu7x:2x2x1
jax: 0.10.0
libtpu: 0.0.40
codegen_flags: <defaults>
</compile_context>

<pallas_src>
import functools

import jax
import jax.numpy as jnp
from jax.experimental import pallas as pl
from jax.experimental.pallas import tpu as pltpu

_LANE = 128


def _vmem_capacity_bytes():
    # Generation-aware VMEM capacity (v5e/v6e: 128 MiB, v7x: 64 MiB per TC).
    try:
        cap = getattr(pltpu.get_tpu_info(), "vmem_capacity_bytes", None)
        if cap:
            return int(cap)
    except Exception:
        pass
    return 64 * 1024 * 1024  # conservative fallback (v7x per-TC)


_VMEM_CAP = _vmem_capacity_bytes()
# Scoped VMEM we request from Mosaic: ~3/4 of physical, capped at 96 MiB.
_VMEM_LIMIT = int(min(_VMEM_CAP * 3 // 4, 96 * 1024 * 1024))
# Budget per pipelined block: 2 arrays (in + out) x 2 pipeline buffers each.
_BLOCK_BUDGET = _VMEM_LIMIT // 4
# Target bytes per block (>= 4 MiB amortizes the ~0.35 us per-step overhead).
_TARGET_BLOCK_BYTES = int(min(_BLOCK_BUDGET, 8 * 1024 * 1024))


def _sublane(dtype):
    # Dense sublane packing: f32 -> 8 rows, bf16 -> 16, int8/fp8 -> 32.
    return max(8, 32 // jnp.dtype(dtype).itemsize)


def _copy_kernel(x_ref, o_ref):
    # Pure lane/sublane-dense copy: the BlockSpecs address the kept prefix of
    # the time axis.  The tail time tile may read (padded) elements from the
    # chomped region of the input; the out-of-range part of the partial
    # output block is masked by Pallas on writeback, so this is correct.
    o_ref[...] = x_ref[...]


def _slice_kernel(x_ref, o_ref, *, k_out):
    # Whole-time-axis path for short sequences (K < 128): static prefix slice.
    o_ref[...] = x_ref[:, :k_out]


@functools.partial(jax.jit, static_argnames=("chomp_size",))
def chomp1d(x, chomp_size):
    """out = x[:, :, :-chomp_size]  with x: [M, H, Kpad] -> [M, H, K]."""
    assert x.ndim == 3, "expected [M, H, Kpad]"
    M, H, Kpad = x.shape
    assert 0 < chomp_size < Kpad, "chomp_size must be in (0, Kpad)"
    K = Kpad - chomp_size
    itemsize = jnp.dtype(x.dtype).itemsize
    sub = _sublane(x.dtype)

    # Flatten (M, H) into one dense row axis; the chomp only touches the last
    # (time) axis, so this reshape is free and contiguous.
    R = M * H
    x2 = x.reshape(R, Kpad)
    out2_shape = jax.ShapeDtypeStruct((R, K), x.dtype)
    cparams = pltpu.CompilerParams(
        dimension_semantics=("parallel",),
        vmem_limit_bytes=_VMEM_LIMIT,
    )

    if K < _LANE:
        # Short sequences: blocks span the full time axis (block dims equal
        # full array dims on the lane axis, so layout is legal for any K /
        # Kpad).  Usually a single grid step; tile rows only if the whole
        # problem would exceed the block budget.
        if R * Kpad * itemsize <= _TARGET_BLOCK_BYTES or R <= sub:
            Rt = R
        else:
            rt = max(1, _TARGET_BLOCK_BYTES // (Kpad * itemsize))
            Rt = max(sub, (rt // sub) * sub)
            Rt = min(Rt, R)
        out2 = pl.pallas_call(
            functools.partial(_slice_kernel, k_out=K),
            out_shape=out2_shape,
            grid_spec=pltpu.PrefetchScalarGridSpec(
                num_scalar_prefetch=0,
                grid=(pl.cdiv(R, Rt),),
                in_specs=[pl.BlockSpec((Rt, Kpad), lambda r: (r, 0))],
                out_specs=pl.BlockSpec((Rt, K), lambda r: (r, 0)),
            ),
            compiler_params=cparams,
        )(x2)
        return out2.reshape(M, H, K)

    # Tiled path (K >= 128): lane-aligned time tile, as large as the block
    # budget allows for one sublane-group of rows, never larger than K.
    max_kt = max(_LANE,
                 (_TARGET_BLOCK_BYTES // (sub * itemsize)) // _LANE * _LANE)
    Kt = min((K // _LANE) * _LANE, max_kt)

    # Rows per block: fill the target block with sublane-dense row groups
    # (multiple of `sub`) or take all rows if they fit.
    rt = max(1, _TARGET_BLOCK_BYTES // (Kt * itemsize))
    if rt >= R or R <= sub:
        Rt = R
    else:
        Rt = max(sub, (rt // sub) * sub)

    grid = (pl.cdiv(R, Rt), pl.cdiv(K, Kt))
    out2 = pl.pallas_call(
        _copy_kernel,
        out_shape=out2_shape,
        grid_spec=pltpu.PrefetchScalarGridSpec(
            num_scalar_prefetch=0,
            grid=grid,
            # Identical index maps: the kept window is a prefix of the padded
            # time axis, so input/output element offsets coincide and the
            # chomped tail of the input is never materialized in the output.
            in_specs=[pl.BlockSpec((Rt, Kt), lambda r, k: (r, k))],
            out_specs=pl.BlockSpec((Rt, Kt), lambda r, k: (r, k)),
        ),
        compiler_params=pltpu.CompilerParams(
            dimension_semantics=("parallel", "parallel"),
            vmem_limit_bytes=_VMEM_LIMIT,
        ),
    )(x2)
    return out2.reshape(M, H, K)


if __name__ == "__main__":
    # Primary example: [M, H, Kpad] = [2, 4, 144], chomp_size = 16 -> K = 128.
    M, H, Kpad, chomp = 2, 4, 144, 16
    x = jax.random.normal(jax.random.PRNGKey(0), (M, H, Kpad), dtype=jnp.float32)
    out = jax.block_until_ready(chomp1d(x, chomp))
    ref = x[:, :, :-chomp]
    assert out.shape == (M, H, Kpad - chomp) and out.dtype == x.dtype
    assert jnp.array_equal(out, ref), "mismatch (tiled path)"

    # Short-sequence path (K < 128): Kpad = 19, chomp = 3 -> K = 16.
    x2 = jax.random.normal(jax.random.PRNGKey(1), (2, 4, 19), dtype=jnp.float32)
    out2 = jax.block_until_ready(chomp1d(x2, 3))
    assert jnp.array_equal(out2, x2[:, :, :-3]), "mismatch (short path)"

    # Unaligned kept length (masked tail tile): Kpad = 210, chomp = 10 -> K = 200.
    x3 = jax.random.normal(jax.random.PRNGKey(2), (2, 4, 210), dtype=jnp.float32)
    out3 = jax.block_until_ready(chomp1d(x3, 10))
    assert jnp.array_equal(out3, x3[:, :, :-10]), "mismatch (tail-masked path)"

    # bf16 (sublane pack 16), non-multiple-of-8 row count: [3, 5, 300], chomp 44.
    x4 = jax.random.normal(jax.random.PRNGKey(3), (3, 5, 300), dtype=jnp.bfloat16)
    out4 = jax.block_until_ready(chomp1d(x4, 44))
    assert jnp.array_equal(out4, x4[:, :, :-44]), "mismatch (bf16 path)"

    print("KERNEL_OK")
</pallas_src>

<mosaic_0001>
module attributes {stable_mosaic.version = 11 : i64} {
  func.func @_copy_kernel(%arg0: i32, %arg1: i32, %arg2: memref<8x128xf32, #tpu.memory_space<vmem>>, %arg3: memref<8x128xf32, #tpu.memory_space<vmem>>) attributes {dimension_semantics = [#tpu.dimension_semantics<parallel>, #tpu.dimension_semantics<parallel>], iteration_bounds = array<i64: 1, 1>, scalar_prefetch = 0 : i64, scratch_operands = 0 : i64, tpu.core_type = #tpu.core_type<tc>, window_params = [{transform_indices = @transform_0, window_bounds = array<i64: 8, 128>}, {transform_indices = @transform_1, window_bounds = array<i64: 8, 128>}]} {
    %c0 = arith.constant 0 : index
    %c0_0 = arith.constant 0 : index
    %0 = vector.load %arg2[%c0, %c0_0] : memref<8x128xf32, #tpu.memory_space<vmem>>, vector<8x128xf32>
    %c0_1 = arith.constant 0 : index
    %c0_2 = arith.constant 0 : index
    %1 = vector.load %arg3[%c0_1, %c0_2] : memref<8x128xf32, #tpu.memory_space<vmem>>, vector<8x128xf32>
    tpu.vector_store %arg3[%c0_1, %c0_2], %0 {strides = array<i32>} : memref<8x128xf32, #tpu.memory_space<vmem>>, vector<8x128xf32>,
    return
  }
  func.func @transform_0(%arg0: i32, %arg1: i32) -> (i32, i32) {
    %c0_i32 = arith.constant 0 : i32
    return %arg0, %arg1 : i32, i32
  }
  func.func @transform_1(%arg0: i32, %arg1: i32) -> (i32, i32) {
    %c0_i32 = arith.constant 0 : i32
    return %arg0, %arg1 : i32, i32
  }
}

</mosaic_0001>

<llo_original>
// kernel: chomp1d.1
$region0: #{chomp1d.1}
  #allocation0 [shape = 'u32[]', space=smem, size = 0x4, offset = 0x4, fixed_abs, tag = 'smem constant byte address 0x4 - core index']
  #allocation1 [shape = 'u32[144,128]{1,0:T(1,128)}', space=vmem, size = 0x12000, scoped, tag = 'internal scratch']
  %s0 = inlined_call_operand.vmem [shape: f32[8,144], index: 0, kind: input, shape index: {}]
  %s1 = inlined_call_operand.hbm [shape: f32[8,128], index: 1, kind: output, shape index: {}]
  %s2 = sld [smem:[#allocation0]]
  $region14: #{chomp1d.1} parent=0
    _
  %s4 = ssub.s32 1, %s2
  %s5 = scalar_select 0, %s4, %s2
  $region1: #{chomp1d.1} parent=0
    #allocation2 [shape = 'u8[4096]{0}', space=vmem, size = 0x1000, scoped, tag = 'output window, operand 0, single buffered']
    #allocation3 [shape = 's32[1]{0}', space=sflag, size = 0x4, scoped, tag = 'scoped memory for chomp1d.1']
    %6 = vsyncpa [#allocation3], 0
    // Predicated region
    $region2: #{chomp1d.1} parent=1 // pred_check
      _
    $region3: #{chomp1d.1} parent=1 // pred_check_branch
      %8 = sbr.rel (0) target = $region5
    $region4: #{chomp1d.1} parent=1 // pred_region
      _
    $region5: #{chomp1d.1} parent=1 // pred_fallthru
      _
    %v9 = vld [vmem:[%s0] sm:$0xff]
    %10 = vst [vmem:[#allocation2] sm:$0xff] %v9
    // Predicated region
    $region6: #{chomp1d.1} parent=1 // pred_check
      _
    $region7: #{chomp1d.1} parent=1 // pred_check_branch
      %12 = sbr.rel (0) target = $region9
    $region8: #{chomp1d.1} parent=1 // pred_region
      %s14 = ssub.s32 128, 128
      %15 = vsyncadd [#allocation3], %s14
      %s17 = sshll.u32 [#allocation2], 4
      %s18 = int_to_ptr.vmem [resolvable:$true] %s17
      %20 = dma.vmem_to_hbm [thread:$0]  %s18, 128, %s1, [#allocation3]
    $region9: #{chomp1d.1} parent=1 // pred_fallthru
      _
    // Predicated region
    $region10: #{chomp1d.1} parent=1 // pred_check
      _
    $region11: #{chomp1d.1} parent=1 // pred_check_branch
      %22 = sbr.rel (0) target = $region13
    $region12: #{chomp1d.1} parent=1 // pred_region
      %23 = dma.done [#allocation3], 128
    $region13: #{chomp1d.1} parent=1 // pred_fallthru
      _
    %24 = vsyncpa [#allocation3], 1

</llo_original>
